<compile_context>
chip_gen: v7x
topology: tpu7x:2x2x1
jax: 0.10.0
libtpu: 0.0.40
codegen_flags: <defaults>
</compile_context>

<pallas_src>
import jax
import jax.numpy as jnp
from jax.experimental import pallas as pl
from jax.experimental.pallas import tpu as pltpu

FEATURE_SIZE = 16 * 5 * 5   # 400
H1, H2, OUT = 120, 84, 10
H1_PAD, H2_PAD, OUT_PAD = 128, 128, 128   # lane-dense padded layer widths


def _round_up(x, m):
    return (x + m - 1) // m * m


def featurenet_kernel(x_ref, w1_ref, b1_ref, w2_ref, b2_ref, w3_ref, b3_ref, out_ref):
    # fc1 + ReLU  (bf16 operands, f32 accumulate)
    h1 = jnp.dot(x_ref[...], w1_ref[...], preferred_element_type=jnp.float32)
    h1 = jnp.maximum(h1 + b1_ref[...], 0.0)
    # fc2 + ReLU
    h2 = jnp.dot(h1.astype(w2_ref.dtype), w2_ref[...], preferred_element_type=jnp.float32)
    h2 = jnp.maximum(h2 + b2_ref[...], 0.0)
    # fc3 (no activation); output columns padded to 128 lanes -> unmasked store
    h3 = jnp.dot(h2.astype(w3_ref.dtype), w3_ref[...], preferred_element_type=jnp.float32)
    out_ref[...] = (h3 + b3_ref[...]).astype(out_ref.dtype)


def _choose_tile_b(b):
    # Largest "nice" batch tile: multiples of 8 (sublane), capped at 256.
    # x tile = 256*400*2 B ~= 200 KB per buffer -> tiny vs VMEM even double-buffered.
    return min(256, _round_up(b, 8))


def _pad2(a, rows, cols):
    return jnp.pad(a, ((0, rows - a.shape[0]), (0, cols - a.shape[1])))


@jax.jit
def featurenet_forward(x, params):
    """x: (B, FEATURE_SIZE) float32; params: dict of w1,b1,w2,b2,w3,b3 (f32, (in,out) weights)."""
    B, F = x.shape
    tile_b = _choose_tile_b(B)
    pb = _round_up(B, tile_b)

    # bf16 operands for the MXU; biases kept f32 (added post-accumulation).
    x_bf = x.astype(jnp.bfloat16)
    if pb != B:
        x_bf = jnp.pad(x_bf, ((0, pb - B), (0, 0)))

    # Zero-pad all layer widths to 128 lanes (exact: padded lanes stay 0 through ReLU
    # and padded weight rows are 0, so they contribute nothing).
    w1 = _pad2(params["w1"], F, H1_PAD).astype(jnp.bfloat16)
    w2 = _pad2(params["w2"], H1_PAD, H2_PAD).astype(jnp.bfloat16)
    w3 = _pad2(params["w3"], H2_PAD, OUT_PAD).astype(jnp.bfloat16)
    b1 = _pad2(params["b1"], 1, H1_PAD)
    b2 = _pad2(params["b2"], 1, H2_PAD)
    b3 = _pad2(params["b3"], 1, OUT_PAD)

    grid = (pb // tile_b,)

    # Weights/biases: constant block index every grid step -> DMA'd once, VMEM-resident.
    const = lambda shape: pl.BlockSpec(shape, lambda i: (0, 0))

    flops = 2 * pb * (F * H1_PAD + H1_PAD * H2_PAD + H2_PAD * OUT_PAD)
    bytes_accessed = (
        x_bf.size * 2
        + (w1.size + w2.size + w3.size) * 2
        + (b1.size + b2.size + b3.size) * 4
        + pb * OUT_PAD * 4
    )

    out_padded = pl.pallas_call(
        featurenet_kernel,
        out_shape=jax.ShapeDtypeStruct((pb, OUT_PAD), jnp.float32),
        grid=grid,
        in_specs=[
            pl.BlockSpec((tile_b, F), lambda i: (i, 0)),   # x: tiled over batch
            const(w1.shape), const(b1.shape),
            const(w2.shape), const(b2.shape),
            const(w3.shape), const(b3.shape),
        ],
        out_specs=pl.BlockSpec((tile_b, OUT_PAD), lambda i: (i, 0)),
        compiler_params=pltpu.CompilerParams(
            dimension_semantics=("parallel",),             # megacore sharding on v7x
        ),
        cost_estimate=pl.CostEstimate(
            flops=flops, transcendentals=0, bytes_accessed=bytes_accessed
        ),
    )(x_bf, w1, b1, w2, b2, w3, b3)

    return out_padded[:B, :OUT]


def init_params(key, feature_size=FEATURE_SIZE):
    """Deterministic init mimicking nn.Linear's uniform(-1/sqrt(fan_in), 1/sqrt(fan_in))."""
    dims = [(feature_size, H1), (H1, H2), (H2, OUT)]
    params = {}
    for i, (fan_in, fan_out) in enumerate(dims, start=1):
        key, kw, kb = jax.random.split(key, 3)
        bound = 1.0 / jnp.sqrt(jnp.float32(fan_in))
        # stored as (in, out) -> x @ W (transpose of PyTorch's (out, in) weight)
        params[f"w{i}"] = jax.random.uniform(
            kw, (fan_in, fan_out), jnp.float32, minval=-bound, maxval=bound
        )
        # bias kept 2-D (1, out) for clean lane-wise broadcast in VMEM
        params[f"b{i}"] = jax.random.uniform(
            kb, (1, fan_out), jnp.float32, minval=-bound, maxval=bound
        )
    return params


def reference_forward_f32(x, params):
    h = jnp.maximum(x @ params["w1"] + params["b1"], 0.0)
    h = jnp.maximum(h @ params["w2"] + params["b2"], 0.0)
    return h @ params["w3"] + params["b3"]


def reference_forward_bf16(x, params):
    """Same quantization choices as the kernel (bf16 operands, f32 accumulate)."""
    bf = jnp.bfloat16
    h = jnp.dot(x.astype(bf), params["w1"].astype(bf), preferred_element_type=jnp.float32)
    h = jnp.maximum(h + params["b1"], 0.0)
    h = jnp.dot(h.astype(bf), params["w2"].astype(bf), preferred_element_type=jnp.float32)
    h = jnp.maximum(h + params["b2"], 0.0)
    h = jnp.dot(h.astype(bf), params["w3"].astype(bf), preferred_element_type=jnp.float32)
    return h + params["b3"]


if __name__ == "__main__":
    key = jax.random.PRNGKey(0)
    key, kx = jax.random.split(key)
    params = init_params(key, FEATURE_SIZE)

    # Small-batch case (single grid step, batch padded to sublane multiple).
    batch = 8
    x = jax.random.normal(kx, (batch, FEATURE_SIZE), jnp.float32)
    out = jax.block_until_ready(featurenet_forward(x, params))
    assert out.shape == (batch, OUT)
    ref_bf16 = reference_forward_bf16(x, params)
    ref_f32 = reference_forward_f32(x, params)
    assert jnp.allclose(out, ref_bf16, atol=2e-3, rtol=2e-3), "mismatch vs bf16 reference"
    assert jnp.allclose(out, ref_f32, atol=5e-2, rtol=5e-2), "mismatch vs f32 reference"

    # Larger batch exercises the multi-step pipelined grid (weights stay VMEM-resident).
    key, kx2 = jax.random.split(key)
    xb = jax.random.normal(kx2, (512, FEATURE_SIZE), jnp.float32)
    outb = jax.block_until_ready(featurenet_forward(xb, params))
    assert outb.shape == (512, OUT)
    assert jnp.allclose(outb, reference_forward_bf16(xb, params), atol=2e-3, rtol=2e-3)

    print("KERNEL_OK")
</pallas_src>

<mosaic_0001>
module attributes {stable_mosaic.version = 11 : i64} {
  func.func @featurenet_kernel(%arg0: i32, %arg1: memref<8x400xbf16, #tpu.memory_space<vmem>>, %arg2: memref<400x128xbf16, #tpu.memory_space<vmem>>, %arg3: memref<1x128xf32, #tpu.memory_space<vmem>>, %arg4: memref<128x128xbf16, #tpu.memory_space<vmem>>, %arg5: memref<1x128xf32, #tpu.memory_space<vmem>>, %arg6: memref<128x128xbf16, #tpu.memory_space<vmem>>, %arg7: memref<1x128xf32, #tpu.memory_space<vmem>>, %arg8: memref<8x128xf32, #tpu.memory_space<vmem>>) attributes {dimension_semantics = [#tpu.dimension_semantics<parallel>], iteration_bounds = array<i64: 1>, scalar_prefetch = 0 : i64, scratch_operands = 0 : i64, tpu.core_type = #tpu.core_type<tc>, window_params = [{transform_indices = @transform_0, window_bounds = array<i64: 8, 400>}, {pipeline_mode = #tpu.pipeline_mode<synchronous>, transform_indices = @transform_1, window_bounds = array<i64: 400, 128>}, {pipeline_mode = #tpu.pipeline_mode<synchronous>, transform_indices = @transform_2, window_bounds = array<i64: 1, 128>}, {pipeline_mode = #tpu.pipeline_mode<synchronous>, transform_indices = @transform_3, window_bounds = array<i64: 128, 128>}, {pipeline_mode = #tpu.pipeline_mode<synchronous>, transform_indices = @transform_4, window_bounds = array<i64: 1, 128>}, {pipeline_mode = #tpu.pipeline_mode<synchronous>, transform_indices = @transform_5, window_bounds = array<i64: 128, 128>}, {pipeline_mode = #tpu.pipeline_mode<synchronous>, transform_indices = @transform_6, window_bounds = array<i64: 1, 128>}, {transform_indices = @transform_7, window_bounds = array<i64: 8, 128>}]} {
    %c0 = arith.constant 0 : index
    %c0_0 = arith.constant 0 : index
    %0 = vector.load %arg1[%c0, %c0_0] : memref<8x400xbf16, #tpu.memory_space<vmem>>, vector<8x400xbf16>
    %c0_1 = arith.constant 0 : index
    %c0_2 = arith.constant 0 : index
    %1 = vector.load %arg2[%c0_1, %c0_2] : memref<400x128xbf16, #tpu.memory_space<vmem>>, vector<400x128xbf16>
    %cst = arith.constant dense<0.000000e+00> : vector<8x128xf32>
    %2 = tpu.matmul %0, %1, %cst {dimension_numbers = #tpu.dot_dimension_numbers<[1], [0], [0], [1], [0, 0, 1, 1], [], []>} : vector<8x400xbf16>, vector<400x128xbf16>, vector<8x128xf32> -> vector<8x128xf32>
    %c0_3 = arith.constant 0 : index
    %c0_4 = arith.constant 0 : index
    %3 = vector.load %arg3[%c0_3, %c0_4] : memref<1x128xf32, #tpu.memory_space<vmem>>, vector<1x128xf32>
    %4 = vector.broadcast %3 : vector<1x128xf32> to vector<8x128xf32>
    %5 = arith.addf %2, %4 : vector<8x128xf32>
    %cst_5 = arith.constant 0.000000e+00 : f32
    %6 = vector.broadcast %cst_5 : f32 to vector<8x128xf32>
    %7 = arith.maximumf %5, %6 : vector<8x128xf32>
    %8 = arith.truncf %7 : vector<8x128xf32> to vector<8x128xbf16>
    %c0_6 = arith.constant 0 : index
    %c0_7 = arith.constant 0 : index
    %9 = vector.load %arg4[%c0_6, %c0_7] : memref<128x128xbf16, #tpu.memory_space<vmem>>, vector<128x128xbf16>
    %cst_8 = arith.constant dense<0.000000e+00> : vector<8x128xf32>
    %10 = tpu.matmul %8, %9, %cst_8 {dimension_numbers = #tpu.dot_dimension_numbers<[1], [0], [0], [1], [0, 0, 1, 1], [], []>} : vector<8x128xbf16>, vector<128x128xbf16>, vector<8x128xf32> -> vector<8x128xf32>
    %c0_9 = arith.constant 0 : index
    %c0_10 = arith.constant 0 : index
    %11 = vector.load %arg5[%c0_9, %c0_10] : memref<1x128xf32, #tpu.memory_space<vmem>>, vector<1x128xf32>
    %12 = vector.broadcast %11 : vector<1x128xf32> to vector<8x128xf32>
    %13 = arith.addf %10, %12 : vector<8x128xf32>
    %cst_11 = arith.constant 0.000000e+00 : f32
    %14 = vector.broadcast %cst_11 : f32 to vector<8x128xf32>
    %15 = arith.maximumf %13, %14 : vector<8x128xf32>
    %16 = arith.truncf %15 : vector<8x128xf32> to vector<8x128xbf16>
    %c0_12 = arith.constant 0 : index
    %c0_13 = arith.constant 0 : index
    %17 = vector.load %arg6[%c0_12, %c0_13] : memref<128x128xbf16, #tpu.memory_space<vmem>>, vector<128x128xbf16>
    %cst_14 = arith.constant dense<0.000000e+00> : vector<8x128xf32>
    %18 = tpu.matmul %16, %17, %cst_14 {dimension_numbers = #tpu.dot_dimension_numbers<[1], [0], [0], [1], [0, 0, 1, 1], [], []>} : vector<8x128xbf16>, vector<128x128xbf16>, vector<8x128xf32> -> vector<8x128xf32>
    %c0_15 = arith.constant 0 : index
    %c0_16 = arith.constant 0 : index
    %19 = vector.load %arg7[%c0_15, %c0_16] : memref<1x128xf32, #tpu.memory_space<vmem>>, vector<1x128xf32>
    %20 = vector.broadcast %19 : vector<1x128xf32> to vector<8x128xf32>
    %21 = arith.addf %18, %20 : vector<8x128xf32>
    %c0_17 = arith.constant 0 : index
    %c0_18 = arith.constant 0 : index
    %22 = vector.load %arg8[%c0_17, %c0_18] : memref<8x128xf32, #tpu.memory_space<vmem>>, vector<8x128xf32>
    tpu.vector_store %arg8[%c0_17, %c0_18], %21 {strides = array<i32>} : memref<8x128xf32, #tpu.memory_space<vmem>>, vector<8x128xf32>,
    return
  }
  func.func @transform_0(%arg0: i32) -> (i32, i32) {
    %c0_i32 = arith.constant 0 : i32
    %c0_i32_0 = arith.constant 0 : i32
    return %arg0, %c0_i32 : i32, i32
  }
  func.func @transform_1(%arg0: i32) -> (i32, i32) {
    %c0_i32 = arith.constant 0 : i32
    %c0_i32_0 = arith.constant 0 : i32
    %c0_i32_1 = arith.constant 0 : i32
    return %c0_i32, %c0_i32_0 : i32, i32
  }
  func.func @transform_2(%arg0: i32) -> (i32, i32) {
    %c0_i32 = arith.constant 0 : i32
    %c0_i32_0 = arith.constant 0 : i32
    %c0_i32_1 = arith.constant 0 : i32
    return %c0_i32, %c0_i32_0 : i32, i32
  }
  func.func @transform_3(%arg0: i32) -> (i32, i32) {
    %c0_i32 = arith.constant 0 : i32
    %c0_i32_0 = arith.constant 0 : i32
    %c0_i32_1 = arith.constant 0 : i32
    return %c0_i32, %c0_i32_0 : i32, i32
  }
  func.func @transform_4(%arg0: i32) -> (i32, i32) {
    %c0_i32 = arith.constant 0 : i32
    %c0_i32_0 = arith.constant 0 : i32
    %c0_i32_1 = arith.constant 0 : i32
    return %c0_i32, %c0_i32_0 : i32, i32
  }
  func.func @transform_5(%arg0: i32) -> (i32, i32) {
    %c0_i32 = arith.constant 0 : i32
    %c0_i32_0 = arith.constant 0 : i32
    %c0_i32_1 = arith.constant 0 : i32
    return %c0_i32, %c0_i32_0 : i32, i32
  }
  func.func @transform_6(%arg0: i32) -> (i32, i32) {
    %c0_i32 = arith.constant 0 : i32
    %c0_i32_0 = arith.constant 0 : i32
    %c0_i32_1 = arith.constant 0 : i32
    return %c0_i32, %c0_i32_0 : i32, i32
  }
  func.func @transform_7(%arg0: i32) -> (i32, i32) {
    %c0_i32 = arith.constant 0 : i32
    %c0_i32_0 = arith.constant 0 : i32
    return %arg0, %c0_i32 : i32, i32
  }
}

</mosaic_0001>

<llo_original>
// kernel: featurenet_forward.1
$region0: #{featurenet_forward.1}
  #allocation0 [shape = 'u32[]', space=smem, size = 0x4, offset = 0x4, fixed_abs, tag = 'smem constant byte address 0x4 - core index']
  #allocation1 [shape = 'u32[144,128]{1,0:T(1,128)}', space=vmem, size = 0x12000, scoped, tag = 'internal scratch']
  %s0 = inlined_call_operand.vmem [shape: bf16[8,400], index: 0, kind: input, shape index: {}]
  %s1 = inlined_call_operand.vmem [shape: bf16[400,128], index: 1, kind: input, shape index: {}]
  %s2 = inlined_call_operand.vmem [shape: f32[1,128], index: 2, kind: input, shape index: {}]
  %s3 = inlined_call_operand.vmem [shape: bf16[128,128], index: 3, kind: input, shape index: {}]
  %s4 = inlined_call_operand.vmem [shape: f32[1,128], index: 4, kind: input, shape index: {}]
  %s5 = inlined_call_operand.vmem [shape: bf16[128,128], index: 5, kind: input, shape index: {}]
  %s6 = inlined_call_operand.vmem [shape: f32[1,128], index: 6, kind: input, shape index: {}]
  %s7 = inlined_call_operand.hbm [shape: f32[8,128], index: 7, kind: output, shape index: {}]
  %s8 = sld [smem:[#allocation0]]
  $region38: #{featurenet_forward.1} parent=0
    _
  %s10 = ssub.s32 1, %s8
  %s11 = scalar_select 0, %s10, %s8
  $region1: #{featurenet_forward.1} parent=0
    #allocation2 [shape = 'u8[4096]{0}', space=vmem, size = 0x1000, scoped, tag = 'output window, operand 0, single buffered']
    #allocation3 [shape = 's32[1]{0}', space=sflag, size = 0x4, scoped, tag = 'scoped memory for featurenet_forward.1']
    %12 = vsyncpa [#allocation3], 0
    // Predicated region
    $region2: #{featurenet_forward.1} parent=1 // pred_check
      _
    $region3: #{featurenet_forward.1} parent=1 // pred_check_branch
      %14 = sbr.rel (0) target = $region5
    $region4: #{featurenet_forward.1} parent=1 // pred_region
      _
    $region5: #{featurenet_forward.1} parent=1 // pred_fallthru
      _
    // Predicated region
    $region6: #{featurenet_forward.1} parent=1 // pred_check
      _
    $region7: #{featurenet_forward.1} parent=1 // pred_check_branch
      %16 = sbr.rel (0) target = $region9
    $region8: #{featurenet_forward.1} parent=1 // pred_region
      _
    $region9: #{featurenet_forward.1} parent=1 // pred_fallthru
      _
    // Predicated region
    $region10: #{featurenet_forward.1} parent=1 // pred_check
      _
    $region11: #{featurenet_forward.1} parent=1 // pred_check_branch
      %18 = sbr.rel (0) target = $region13
    $region12: #{featurenet_forward.1} parent=1 // pred_region
      _
    $region13: #{featurenet_forward.1} parent=1 // pred_fallthru
      _
    // Predicated region
    $region14: #{featurenet_forward.1} parent=1 // pred_check
      _
    $region15: #{featurenet_forward.1} parent=1 // pred_check_branch
      %20 = sbr.rel (0) target = $region17
    $region16: #{featurenet_forward.1} parent=1 // pred_region
      _
    $region17: #{featurenet_forward.1} parent=1 // pred_fallthru
      _
    // Predicated region
    $region18: #{featurenet_forward.1} parent=1 // pred_check
      _
    $region19: #{featurenet_forward.1} parent=1 // pred_check_branch
      %22 = sbr.rel (0) target = $region21
    $region20: #{featurenet_forward.1} parent=1 // pred_region
      _
    $region21: #{featurenet_forward.1} parent=1 // pred_fallthru
      _
    // Predicated region
    $region22: #{featurenet_forward.1} parent=1 // pred_check
      _
    $region23: #{featurenet_forward.1} parent=1 // pred_check_branch
      %24 = sbr.rel (0) target = $region25
    $region24: #{featurenet_forward.1} parent=1 // pred_region
      _
    $region25: #{featurenet_forward.1} parent=1 // pred_fallthru
      _
    // Predicated region
    $region26: #{featurenet_forward.1} parent=1 // pred_check
      _
    $region27: #{featurenet_forward.1} parent=1 // pred_check_branch
      %26 = sbr.rel (0) target = $region29
    $region28: #{featurenet_forward.1} parent=1 // pred_region
      _
    $region29: #{featurenet_forward.1} parent=1 // pred_fallthru
      _
    %v28 = vld [vmem:[%s0] sm:$0xff]
    %v29 = vld [vmem:[%s0 + $0x8] sm:$0xff]
    %v30 = vld [vmem:[%s1] sm:$0xf]
    %v31 = vld [vmem:[%s1 + $0x4] sm:$0xf]
    %v32 = vld [vmem:[%s1 + $0x8] sm:$0xf]
    %v33 = vld [vmem:[%s1 + $0xc] sm:$0xf]
    %v34 = vld [vmem:[%s1 + $0x10] sm:$0xf]
    %v35 = vld [vmem:[%s1 + $0x14] sm:$0xf]
    %v36 = vld [vmem:[%s1 + $0x18] sm:$0xf]
    %v37 = vld [vmem:[%s1 + $0x1c] sm:$0xf]
    %v38 = vld [vmem:[%s1 + $0x20] sm:$0xf]
    %v39 = vld [vmem:[%s1 + $0x24] sm:$0xf]
    %v40 = vld [vmem:[%s1 + $0x28] sm:$0xf]
    %v41 = vld [vmem:[%s1 + $0x2c] sm:$0xf]
    %v42 = vld [vmem:[%s1 + $0x30] sm:$0xf]
    %v43 = vld [vmem:[%s1 + $0x34] sm:$0xf]
    %v44 = vld [vmem:[%s1 + $0x38] sm:$0xf]
    %v45 = vld [vmem:[%s1 + $0x3c] sm:$0xf]
    %v46 = vld [vmem:[%s1 + $0x40] sm:$0xf]
    %v47 = vld [vmem:[%s1 + $0x44] sm:$0xf]
    %v48 = vld [vmem:[%s1 + $0x48] sm:$0xf]
    %v49 = vld [vmem:[%s1 + $0x4c] sm:$0xf]
    %v50 = vld [vmem:[%s1 + $0x50] sm:$0xf]
    %v51 = vld [vmem:[%s1 + $0x54] sm:$0xf]
    %v52 = vld [vmem:[%s1 + $0x58] sm:$0xf]
    %v53 = vld [vmem:[%s1 + $0x5c] sm:$0xf]
    %v54 = vld [vmem:[%s1 + $0x60] sm:$0xf]
    %v55 = vld [vmem:[%s1 + $0x64] sm:$0xf]
    %v56 = vld [vmem:[%s1 + $0x68] sm:$0xf]
    %v57 = vld [vmem:[%s1 + $0x6c] sm:$0xf]
    %v58 = vld [vmem:[%s1 + $0x70] sm:$0xf]
    %v59 = vld [vmem:[%s1 + $0x74] sm:$0xf]
    %v60 = vld [vmem:[%s1 + $0x78] sm:$0xf]
    %v61 = vld [vmem:[%s1 + $0x7c] sm:$0xf]
    %v62 = vld [vmem:[%s1 + $0x80] sm:$0xf]
    %v63 = vld [vmem:[%s1 + $0x84] sm:$0xf]
    %v64 = vld [vmem:[%s1 + $0x88] sm:$0xf]
    %v65 = vld [vmem:[%s1 + $0x8c] sm:$0xf]
    %v66 = vld [vmem:[%s1 + $0x90] sm:$0xf]
    %v67 = vld [vmem:[%s1 + $0x94] sm:$0xf]
    %v68 = vld [vmem:[%s1 + $0x98] sm:$0xf]
    %v69 = vld [vmem:[%s1 + $0x9c] sm:$0xf]
    %v70 = vld [vmem:[%s1 + $0xa0] sm:$0xf]
    %v71 = vld [vmem:[%s1 + $0xa4] sm:$0xf]
    %v72 = vld [vmem:[%s1 + $0xa8] sm:$0xf]
    %v73 = vld [vmem:[%s1 + $0xac] sm:$0xf]
    %v74 = vld [vmem:[%s1 + $0xb0] sm:$0xf]
    %v75 = vld [vmem:[%s1 + $0xb4] sm:$0xf]
    %v76 = vld [vmem:[%s1 + $0xb8] sm:$0xf]
    %v77 = vld [vmem:[%s1 + $0xbc] sm:$0xf]
    %v78 = vld [vmem:[%s1 + $0xc0] sm:$0xf]
    %v79 = vld [vmem:[%s1 + $0xc4] sm:$0xf]
    %v80 = vld [vmem:[%s2] sm:$0x1]
    %v82 = vlaneseq
    %v83 = vshrl.u32 %v82, 7
    %v84 = vsub.s32 0, %v83
    %v85 = vrot.slane %v80, %v84
    %v89 = vunpack.c.l.b16 %v28
    %v90 = vunpack.c.h.b16 %v28
    %v91 = vunpack.c.l.b16 %v29
    %v92 = vunpack.c.h.b16 %v29
    %v93 = vpack.c.b16 %v89, %v89
    %v94 = vpack.c.b16 %v90, %v90
    %v95 = vpack.c.b16 %v91, %v91
    %v96 = vpack.c.b16 %v92, %v92
    %v150 = vunpack.c.l.b16 %v30
    %v151 = vunpack.c.l.b16 %v31
    %v152 = vunpack.c.l.b16 %v32
    %v153 = vunpack.c.l.b16 %v33
    %v154 = vunpack.c.l.b16 %v34
    %v155 = vunpack.c.l.b16 %v35
    %v156 = vunpack.c.l.b16 %v36
    %v157 = vunpack.c.l.b16 %v37
    %v158 = vunpack.c.l.b16 %v38
    %v159 = vunpack.c.l.b16 %v39
    %v160 = vunpack.c.l.b16 %v40
    %v161 = vunpack.c.l.b16 %v41
    %v162 = vunpack.c.l.b16 %v42
    %v163 = vunpack.c.l.b16 %v43
    %v164 = vunpack.c.l.b16 %v44
    %v165 = vunpack.c.l.b16 %v45
    %v166 = vunpack.c.l.b16 %v46
    %v167 = vunpack.c.l.b16 %v47
    %v168 = vunpack.c.l.b16 %v48
    %v169 = vunpack.c.l.b16 %v49
    %v170 = vunpack.c.l.b16 %v50
    %v171 = vunpack.c.l.b16 %v51
    %v172 = vunpack.c.l.b16 %v52
    %v173 = vunpack.c.l.b16 %v53
    %v174 = vunpack.c.l.b16 %v54
    %v175 = vunpack.c.l.b16 %v55
    %v176 = vunpack.c.l.b16 %v56
    %v177 = vunpack.c.l.b16 %v57
    %v178 = vunpack.c.l.b16 %v58
    %v179 = vunpack.c.l.b16 %v59
    %v180 = vunpack.c.l.b16 %v60
    %v181 = vunpack.c.l.b16 %v61
    %v182 = vunpack.c.l.b16 %v62
    %v183 = vunpack.c.l.b16 %v63
    %v184 = vunpack.c.l.b16 %v64
    %v185 = vunpack.c.l.b16 %v65
    %v186 = vunpack.c.l.b16 %v66
    %v187 = vunpack.c.l.b16 %v67
    %v188 = vunpack.c.l.b16 %v68
    %v189 = vunpack.c.l.b16 %v69
    %v190 = vunpack.c.l.b16 %v70
    %v191 = vunpack.c.l.b16 %v71
    %v192 = vunpack.c.l.b16 %v72
    %v193 = vunpack.c.l.b16 %v73
    %v194 = vunpack.c.l.b16 %v74
    %v195 = vunpack.c.l.b16 %v75
    %v196 = vunpack.c.l.b16 %v76
    %v197 = vunpack.c.l.b16 %v77
    %v198 = vunpack.c.l.b16 %v78
    %v199 = vunpack.c.l.b16 %v79
    %v200 = vpack.c.b16 %v151, %v150
    %v201 = vpack.c.b16 %v153, %v152
    %v202 = vpack.c.b16 %v155, %v154
    %v203 = vpack.c.b16 %v157, %v156
    %v204 = vpack.c.b16 %v159, %v158
    %v205 = vpack.c.b16 %v161, %v160
    %v206 = vpack.c.b16 %v163, %v162
    %v207 = vpack.c.b16 %v165, %v164
    %v208 = vpack.c.b16 %v167, %v166
    %v209 = vpack.c.b16 %v169, %v168
    %v210 = vpack.c.b16 %v171, %v170
    %v211 = vpack.c.b16 %v173, %v172
    %v212 = vpack.c.b16 %v175, %v174
    %v213 = vpack.c.b16 %v177, %v176
    %v214 = vpack.c.b16 %v179, %v178
    %v215 = vpack.c.b16 %v181, %v180
    %v216 = vpack.c.b16 %v183, %v182
    %v217 = vpack.c.b16 %v185, %v184
    %v218 = vpack.c.b16 %v187, %v186
    %v219 = vpack.c.b16 %v189, %v188
    %v220 = vpack.c.b16 %v191, %v190
    %v221 = vpack.c.b16 %v193, %v192
    %v222 = vpack.c.b16 %v195, %v194
    %v223 = vpack.c.b16 %v197, %v196
    %v224 = vpack.c.b16 %v199, %v198
    %vm250 = vcmask 130048
    %v252 = vsel %vm250, %v96, 0
    %254 = vmatprep.subr.bf16.mxu0 0
    %255 = vmatpush1.bf16.msra.mxu0 %v200
    %256 = vmatprep.subr.bf16.mxu0 0
    %257 = vmatpush1.bf16.msra.mxu0 %v201
    %258 = vmatprep.subr.bf16.mxu0 0
    %259 = vmatpush1.bf16.msra.mxu0 %v202
    %260 = vmatprep.subr.bf16.mxu0 0
    %261 = vmatpush1.bf16.msra.mxu0 %v203
    %262 = vmatprep.subr.bf16.mxu0 0
    %263 = vmatpush1.bf16.msra.mxu0 %v204
    %264 = vmatprep.subr.bf16.mxu0 0
    %265 = vmatpush1.bf16.msra.mxu0 %v205
    %266 = vmatprep.subr.bf16.mxu0 0
    %267 = vmatpush1.bf16.msra.mxu0 %v206
    %268 = vmatprep.subr.bf16.mxu0 0
    %269 = vmatpush1.bf16.msra.mxu0 %v207
    %270 = vmatprep.subr.bf16.mxu0 0
    %271 = vmatpush1.bf16.msra.mxu0 %v208
    %272 = vmatprep.subr.bf16.mxu0 0
    %273 = vmatpush1.bf16.msra.mxu0 %v209
    %274 = vmatprep.subr.bf16.mxu0 0
    %275 = vmatpush1.bf16.msra.mxu0 %v210
    %276 = vmatprep.subr.bf16.mxu0 0
    %277 = vmatpush1.bf16.msra.mxu0 %v211
    %278 = vmatprep.subr.bf16.mxu0 0
    %279 = vmatpush1.bf16.msra.mxu0 %v212
    %280 = vmatprep.subr.bf16.mxu0 0
    %281 = vmatpush1.bf16.msra.mxu0 %v213
    %282 = vmatprep.subr.bf16.mxu0 0
    %283 = vmatpush1.bf16.msra.mxu0 %v214
    %284 = vmatprep.subr.bf16.mxu0 0
    %285 = vmatpush1.bf16.msra.mxu0 %v215
    %286 = vmatprep.mubr.bf16.mxu0 %v94
    %287 = vmatmul.mubr.bf16.gmra.mrb[0].mxu0 %v93
    %v288 = vpop.f32.mrb[0].mxu0
    %v289 = vadd.f32 %v85, %v288
    %v290 = vpop.f32.mrb[0].mxu0
    %v291 = vpop.f32.mrb[0].mxu0
    %v292 = vpop.f32.mrb[0].mxu0
    %293 = vdwg.mxu0
    %294 = vmatprep.subr.bf16.mxu0 0
    %295 = vmatpush1.bf16.msra.mxu0 %v216
    %296 = vmatprep.subr.bf16.mxu0 0
    %297 = vmatpush1.bf16.msra.mxu0 %v217
    %298 = vmatprep.subr.bf16.mxu0 0
    %299 = vmatpush1.bf16.msra.mxu0 %v218
    %300 = vmatprep.subr.bf16.mxu0 0
    %301 = vmatpush1.bf16.msra.mxu0 %v219
    %302 = vmatprep.subr.bf16.mxu0 0
    %303 = vmatpush1.bf16.msra.mxu0 %v220
    %304 = vmatprep.subr.bf16.mxu0 0
    %305 = vmatpush1.bf16.msra.mxu0 %v221
    %306 = vmatprep.subr.bf16.mxu0 0
    %307 = vmatpush1.bf16.msra.mxu0 %v222
    %308 = vmatprep.subr.bf16.mxu0 0
    %309 = vmatpush1.bf16.msra.mxu0 %v223
    %310 = vmatprep.subr.bf16.mxu0 0
    %311 = vmatpush1.bf16.msra.mxu0 %v224
    %312 = vmatprep.subr.bf16.mxu0 0
    %313 = vmatpush1.bf16.msra.mxu0 0
    %314 = vmatprep.subr.bf16.mxu0 0
    %315 = vmatpush1.bf16.msra.mxu0 0
    %316 = vmatprep.subr.bf16.mxu0 0
    %317 = vmatpush1.bf16.msra.mxu0 0
    %318 = vmatprep.subr.bf16.mxu0 0
    %319 = vmatpush1.bf16.msra.mxu0 0
    %320 = vmatprep.subr.bf16.mxu0 0
    %321 = vmatpush1.bf16.msra.mxu0 0
    %322 = vmatprep.subr.bf16.mxu0 0
    %323 = vmatpush1.bf16.msra.mxu0 0
    %324 = vmatprep.subr.bf16.mxu0 0
    %325 = vmatpush1.bf16.msra.mxu0 0
    %326 = vmatprep.mubr.bf16.mxu0 %v252
    %327 = vmatmul.mubr.bf16.gmra.mrb[0].mxu0 %v95
    %v328 = vpop.f32.mrb[0].mxu0
    %v329 = vadd.f32 %v289, %v328
    %v330 = vpop.f32.mrb[0].mxu0
    %v331 = vpop.f32.mrb[0].mxu0
    %v332 = vpop.f32.mrb[0].mxu0
    %333 = vdwg.mxu0
    %v334 = vmax.f32 %v329, 0.0
    %v335 = vpack.c.bf16 %v334, %v334
    %v336 = vld [vmem:[%s3] sm:$0xf]
    %v337 = vld [vmem:[%s3 + $0x4] sm:$0xf]
    %v338 = vld [vmem:[%s3 + $0x8] sm:$0xf]
    %v339 = vld [vmem:[%s3 + $0xc] sm:$0xf]
    %v340 = vld [vmem:[%s3 + $0x10] sm:$0xf]
    %v341 = vld [vmem:[%s3 + $0x14] sm:$0xf]
    %v342 = vld [vmem:[%s3 + $0x18] sm:$0xf]
    %v343 = vld [vmem:[%s3 + $0x1c] sm:$0xf]
    %v344 = vld [vmem:[%s3 + $0x20] sm:$0xf]
    %v345 = vld [vmem:[%s3 + $0x24] sm:$0xf]
    %v346 = vld [vmem:[%s3 + $0x28] sm:$0xf]
    %v347 = vld [vmem:[%s3 + $0x2c] sm:$0xf]
    %v348 = vld [vmem:[%s3 + $0x30] sm:$0xf]
    %v349 = vld [vmem:[%s3 + $0x34] sm:$0xf]
    %v350 = vld [vmem:[%s3 + $0x38] sm:$0xf]
    %v351 = vld [vmem:[%s3 + $0x3c] sm:$0xf]
    %v352 = vld [vmem:[%s4] sm:$0x1]
    %v354 = vlaneseq
    %v355 = vshrl.u32 %v354, 7
    %v356 = vsub.s32 0, %v355
    %v357 = vrot.slane %v352, %v356
    %v375 = vunpack.c.l.b16 %v336
    %v376 = vunpack.c.l.b16 %v337
    %v377 = vunpack.c.l.b16 %v338
    %v378 = vunpack.c.l.b16 %v339
    %v379 = vunpack.c.l.b16 %v340
    %v380 = vunpack.c.l.b16 %v341
    %v381 = vunpack.c.l.b16 %v342
    %v382 = vunpack.c.l.b16 %v343
    %v383 = vunpack.c.l.b16 %v344
    %v384 = vunpack.c.l.b16 %v345
    %v385 = vunpack.c.l.b16 %v346
    %v386 = vunpack.c.l.b16 %v347
    %v387 = vunpack.c.l.b16 %v348
    %v388 = vunpack.c.l.b16 %v349
    %v389 = vunpack.c.l.b16 %v350
    %v390 = vunpack.c.l.b16 %v351
    %v391 = vpack.c.b16 %v376, %v375
    %v392 = vpack.c.b16 %v378, %v377
    %v393 = vpack.c.b16 %v380, %v379
    %v394 = vpack.c.b16 %v382, %v381
    %v395 = vpack.c.b16 %v384, %v383
    %v396 = vpack.c.b16 %v386, %v385
    %v397 = vpack.c.b16 %v388, %v387
    %v398 = vpack.c.b16 %v390, %v389
    %407 = vmatprep.subr.bf16.mxu0 0
    %408 = vmatpush1.bf16.msra.mxu0 %v391
    %409 = vmatprep.subr.bf16.mxu0 0
    %410 = vmatpush1.bf16.msra.mxu0 %v392
    %411 = vmatprep.subr.bf16.mxu0 0
    %412 = vmatpush1.bf16.msra.mxu0 %v393
    %413 = vmatprep.subr.bf16.mxu0 0
    %414 = vmatpush1.bf16.msra.mxu0 %v394
    %415 = vmatprep.subr.bf16.mxu0 0
    %416 = vmatpush1.bf16.msra.mxu0 %v395
    %417 = vmatprep.subr.bf16.mxu0 0
    %418 = vmatpush1.bf16.msra.mxu0 %v396
    %419 = vmatprep.subr.bf16.mxu0 0
    %420 = vmatpush1.bf16.msra.mxu0 %v397
    %421 = vmatprep.subr.bf16.mxu0 0
    %422 = vmatpush1.bf16.msra.mxu0 %v398
    %423 = vmatprep.subr.bf16.mxu0 0
    %424 = vmatpush1.bf16.msra.mxu0 0
    %425 = vmatprep.subr.bf16.mxu0 0
    %426 = vmatpush1.bf16.msra.mxu0 0
    %427 = vmatprep.subr.bf16.mxu0 0
    %428 = vmatpush1.bf16.msra.mxu0 0
    %429 = vmatprep.subr.bf16.mxu0 0
    %430 = vmatpush1.bf16.msra.mxu0 0
    %431 = vmatprep.subr.bf16.mxu0 0
    %432 = vmatpush1.bf16.msra.mxu0 0
    %433 = vmatprep.subr.bf16.mxu0 0
    %434 = vmatpush1.bf16.msra.mxu0 0
    %435 = vmatprep.subr.bf16.mxu0 0
    %436 = vmatpush1.bf16.msra.mxu0 0
    %437 = vmatprep.subr.bf16.mxu0 0
    %438 = vmatpush1.bf16.msra.mxu0 0
    %439 = vmatprep.mubr.bf16.mxu0 0
    %440 = vmatmul.mubr.bf16.gmra.mrb[0].mxu0 %v335
    %v441 = vpop.f32.mrb[0].mxu0
    %v442 = vadd.f32 %v357, %v441
    %v443 = vpop.f32.mrb[0].mxu0
    %v444 = vpop.f32.mrb[0].mxu0
    %v445 = vpop.f32.mrb[0].mxu0
    %446 = vdwg.mxu0
    %v447 = vmax.f32 %v442, 0.0
    %v448 = vpack.c.bf16 %v447, %v447
    %v449 = vld [vmem:[%s5] sm:$0xf]
    %v450 = vld [vmem:[%s5 + $0x4] sm:$0xf]
    %v451 = vld [vmem:[%s5 + $0x8] sm:$0xf]
    %v452 = vld [vmem:[%s5 + $0xc] sm:$0xf]
    %v453 = vld [vmem:[%s5 + $0x10] sm:$0xf]
    %v454 = vld [vmem:[%s5 + $0x14] sm:$0xf]
    %v455 = vld [vmem:[%s5 + $0x18] sm:$0xf]
    %v456 = vld [vmem:[%s5 + $0x1c] sm:$0xf]
    %v457 = vld [vmem:[%s5 + $0x20] sm:$0xf]
    %v458 = vld [vmem:[%s5 + $0x24] sm:$0xf]
    %v459 = vld [vmem:[%s5 + $0x28] sm:$0xf]
    %v460 = vld [vmem:[%s5 + $0x2c] sm:$0xf]
    %v461 = vld [vmem:[%s5 + $0x30] sm:$0xf]
    %v462 = vld [vmem:[%s5 + $0x34] sm:$0xf]
    %v463 = vld [vmem:[%s5 + $0x38] sm:$0xf]
    %v464 = vld [vmem:[%s5 + $0x3c] sm:$0xf]
    %v465 = vld [vmem:[%s6] sm:$0x1]
    %v467 = vlaneseq
    %v468 = vshrl.u32 %v467, 7
    %v469 = vsub.s32 0, %v468
    %v470 = vrot.slane %v465, %v469
    %v488 = vunpack.c.l.b16 %v449
    %v489 = vunpack.c.l.b16 %v450
    %v490 = vunpack.c.l.b16 %v451
    %v491 = vunpack.c.l.b16 %v452
    %v492 = vunpack.c.l.b16 %v453
    %v493 = vunpack.c.l.b16 %v454
    %v494 = vunpack.c.l.b16 %v455
    %v495 = vunpack.c.l.b16 %v456
    %v496 = vunpack.c.l.b16 %v457
    %v497 = vunpack.c.l.b16 %v458
    %v498 = vunpack.c.l.b16 %v459
    %v499 = vunpack.c.l.b16 %v460
    %v500 = vunpack.c.l.b16 %v461
    %v501 = vunpack.c.l.b16 %v462
    %v502 = vunpack.c.l.b16 %v463
    %v503 = vunpack.c.l.b16 %v464
    %v504 = vpack.c.b16 %v489, %v488
    %v505 = vpack.c.b16 %v491, %v490
    %v506 = vpack.c.b16 %v493, %v492
    %v507 = vpack.c.b16 %v495, %v494
    %v508 = vpack.c.b16 %v497, %v496
    %v509 = vpack.c.b16 %v499, %v498
    %v510 = vpack.c.b16 %v501, %v500
    %v511 = vpack.c.b16 %v503, %v502
    %520 = vmatprep.subr.bf16.mxu0 0
    %521 = vmatpush1.bf16.msra.mxu0 %v504
    %522 = vmatprep.subr.bf16.mxu0 0
    %523 = vmatpush1.bf16.msra.mxu0 %v505
    %524 = vmatprep.subr.bf16.mxu0 0
    %525 = vmatpush1.bf16.msra.mxu0 %v506
    %526 = vmatprep.subr.bf16.mxu0 0
    %527 = vmatpush1.bf16.msra.mxu0 %v507
    %528 = vmatprep.subr.bf16.mxu0 0
    %529 = vmatpush1.bf16.msra.mxu0 %v508
    %530 = vmatprep.subr.bf16.mxu0 0
    %531 = vmatpush1.bf16.msra.mxu0 %v509
    %532 = vmatprep.subr.bf16.mxu0 0
    %533 = vmatpush1.bf16.msra.mxu0 %v510
    %534 = vmatprep.subr.bf16.mxu0 0
    %535 = vmatpush1.bf16.msra.mxu0 %v511
    %536 = vmatprep.subr.bf16.mxu0 0
    %537 = vmatpush1.bf16.msra.mxu0 0
    %538 = vmatprep.subr.bf16.mxu0 0
    %539 = vmatpush1.bf16.msra.mxu0 0
    %540 = vmatprep.subr.bf16.mxu0 0
    %541 = vmatpush1.bf16.msra.mxu0 0
    %542 = vmatprep.subr.bf16.mxu0 0
    %543 = vmatpush1.bf16.msra.mxu0 0
    %544 = vmatprep.subr.bf16.mxu0 0
    %545 = vmatpush1.bf16.msra.mxu0 0
    %546 = vmatprep.subr.bf16.mxu0 0
    %547 = vmatpush1.bf16.msra.mxu0 0
    %548 = vmatprep.subr.bf16.mxu0 0
    %549 = vmatpush1.bf16.msra.mxu0 0
    %550 = vmatprep.subr.bf16.mxu0 0
    %551 = vmatpush1.bf16.msra.mxu0 0
    %552 = vmatprep.mubr.bf16.mxu0 0
    %553 = vmatmul.mubr.bf16.gmra.mrb[0].mxu0 %v448
    %v554 = vpop.f32.mrb[0].mxu0
    %v555 = vadd.f32 %v470, %v554
    %v556 = vpop.f32.mrb[0].mxu0
    %v557 = vpop.f32.mrb[0].mxu0
    %v558 = vpop.f32.mrb[0].mxu0
    %559 = vdwg.mxu0
    %560 = vst [vmem:[#allocation2] sm:$0xff] %v555
    // Predicated region
    $region30: #{featurenet_forward.1} parent=1 // pred_check
      _
    $region31: #{featurenet_forward.1} parent=1 // pred_check_branch
      %562 = sbr.rel (0) target = $region33
    $region32: #{featurenet_forward.1} parent=1 // pred_region
      %s564 = ssub.s32 128, 128
      %565 = vsyncadd [#allocation3], %s564
      %s567 = sshll.u32 [#allocation2], 4
      %s568 = int_to_ptr.vmem [resolvable:$true] %s567
      %570 = dma.vmem_to_hbm [thread:$0]  %s568, 128, %s7, [#allocation3]
    $region33: #{featurenet_forward.1} parent=1 // pred_fallthru
      _
    // Predicated region
    $region34: #{featurenet_forward.1} parent=1 // pred_check
      _
    $region35: #{featurenet_forward.1} parent=1 // pred_check_branch
      %572 = sbr.rel (0) target = $region37
    $region36: #{featurenet_forward.1} parent=1 // pred_region
      %573 = dma.done [#allocation3], 128
    $region37: #{featurenet_forward.1} parent=1 // pred_fallthru
      _
    %574 = vsyncpa [#allocation3], 1

</llo_original>
